<compile_context>
chip_gen: v7x
topology: tpu7x:2x2x1
jax: 0.10.0
libtpu: 0.0.40
codegen_flags: <defaults>
</compile_context>

<pallas_src>
import functools

import jax
import jax.numpy as jnp
from jax.experimental import pallas as pl
from jax.experimental.pallas import tpu as pltpu

# ----------------------------- model hyper-params -----------------------------
VOCAB = 128
D_MODEL = 32
D_FF = 64
N_PASSAGES = 2
PASSAGE_LEN = 8
BSZ = 2
EPS = 1e-6
NEG_INF = -1e9


# --------------------------------- helpers ------------------------------------
def _rms_norm(h, w):
    var = jnp.mean(h * h, axis=-1, keepdims=True)
    return h * jax.lax.rsqrt(var + EPS) * w


def _rel_position_bias(seq_len, bias_table):
    # simple deterministic "relative attention bias": bucket = rel_pos + (L-1)
    pos = jnp.arange(seq_len)
    rel = pos[None, :] - pos[:, None]                 # (L, L) in [-(L-1), L-1]
    bucket = jnp.clip(rel + (seq_len - 1), 0, 2 * seq_len - 2)
    return bias_table[bucket].astype(jnp.float32)     # (L, L)


# --------------------------------- kernel ------------------------------------
def fid_passage_encoder_kernel(x_ref, mask_ref, pbias_ref, w_ref, w1_ref, w2_ref,
                               out_ref):
    """One T5 encoder block for ONE passage (one grid step).

    x_ref:     (1, L, D)  hidden states of this passage
    mask_ref:  (1, 1, L)  attention mask (1.0 = keep, 0.0 = padding)
    pbias_ref: (L, L)     relative-position bias (constant across grid steps)
    w_ref:     (5, D, D)  [wq, wk, wv, wo, ln_rows] (ln_rows: row0=ln1, row1=ln2,
                          row2=ln_final, rest zero-padding)
    w1_ref:    (D, Dff)   FFN up projection
    w2_ref:    (Dff, D)   FFN down projection
    """
    x = x_ref[0]                                      # (L, D)
    mask = mask_ref[0]                                # (1, L)

    # Additive attention bias built in-kernel on the VPU: padding columns get
    # -1e9 (applied BEFORE the row max, matching the reference softmax).
    bias = pbias_ref[...] + jnp.where(mask > 0.5, 0.0, NEG_INF)   # (L, L)

    ln = w_ref[4]                                     # (D, D); rows 0..2 used

    # ---- self-attention (T5 style: no 1/sqrt(d) scaling, single head) ----
    hn = _rms_norm(x, ln[0:1, :])
    q = jnp.dot(hn, w_ref[0], preferred_element_type=jnp.float32)   # (L, D)
    k = jnp.dot(hn, w_ref[1], preferred_element_type=jnp.float32)   # (L, D)
    v = jnp.dot(hn, w_ref[2], preferred_element_type=jnp.float32)   # (L, D)

    # contract last dims of q and k -> no explicit transpose of k
    s = jax.lax.dot_general(q, k, (((1,), (1,)), ((), ())),
                            preferred_element_type=jnp.float32) + bias  # (L, L)
    s = s - jnp.max(s, axis=-1, keepdims=True)
    p = jnp.exp(s)
    p = p * pl.reciprocal(jnp.sum(p, axis=-1, keepdims=True), approx=True)

    attn = jnp.dot(p, v, preferred_element_type=jnp.float32)            # (L, D)
    h = x + jnp.dot(attn, w_ref[3], preferred_element_type=jnp.float32)

    # ---- ReLU feed-forward ----
    hn2 = _rms_norm(h, ln[1:2, :])
    f = jnp.maximum(
        jnp.dot(hn2, w1_ref[...], preferred_element_type=jnp.float32), 0.0)
    h = h + jnp.dot(f, w2_ref[...], preferred_element_type=jnp.float32)

    # ---- final RMSNorm of the encoder stack ----
    out_ref[0] = _rms_norm(h, ln[2:3, :])


# --------------------------------- wrapper -----------------------------------
@functools.partial(jax.jit, static_argnames=("n_passages",))
def encoder_wrapper_forward(input_ids, attention_mask, params, n_passages):
    """FiD EncoderWrapper.forward."""
    bsz, total_length = input_ids.shape
    L = total_length // n_passages
    BP = bsz * n_passages

    # FiD view: (bsz, n_passages * L) -> (bsz * n_passages, L)
    ids = input_ids.reshape(BP, L)
    mask = attention_mask.reshape(BP, 1, L).astype(jnp.float32)

    # embedding lookup (glue, plain JAX)
    x = jnp.take(params["embed"], ids, axis=0).astype(jnp.float32)      # (BP, L, D)
    D = x.shape[-1]
    DFF = params["w1"].shape[-1]

    # (L, L) relative-position bias: a model constant, stays VMEM-resident.
    pbias = _rel_position_bias(L, params["rel_bias"])

    # Pack the per-head projections and the RMSNorm rows into one (5, D, D)
    # slab (leading-dim indexed in the kernel -> no sub-128-lane column slices).
    ln_pad = jnp.zeros((D, D), jnp.float32)
    ln_pad = ln_pad.at[0, :].set(params["ln1"][0])
    ln_pad = ln_pad.at[1, :].set(params["ln2"][0])
    ln_pad = ln_pad.at[2, :].set(params["lnf"][0])
    wstack = jnp.stack(
        [params["wq"], params["wk"], params["wv"], params["wo"], ln_pad], axis=0)

    out = pl.pallas_call(
        fid_passage_encoder_kernel,
        out_shape=jax.ShapeDtypeStruct((BP, L, D), jnp.float32),
        grid=(BP,),
        in_specs=[
            pl.BlockSpec((1, L, D), lambda b: (b, 0, 0)),    # x: per passage
            pl.BlockSpec((1, 1, L), lambda b: (b, 0, 0)),    # mask: per passage
            pl.BlockSpec((L, L), lambda b: (0, 0)),          # pbias: resident
            pl.BlockSpec((5, D, D), lambda b: (0, 0, 0)),    # wq/wk/wv/wo/ln
            pl.BlockSpec((D, DFF), lambda b: (0, 0)),        # w1: resident
            pl.BlockSpec((DFF, D), lambda b: (0, 0)),        # w2: resident
        ],
        out_specs=pl.BlockSpec((1, L, D), lambda b: (b, 0, 0)),
        compiler_params=pltpu.CompilerParams(
            dimension_semantics=("parallel",)),
    )(x, mask, pbias, wstack, params["w1"], params["w2"])

    # FiD view back: (BP, L, D) -> (bsz, n_passages*L, D)  (contiguous, free)
    return out.reshape(bsz, n_passages * L, D)


# ------------------------- pure-JAX reference (check) -------------------------
def reference_forward(input_ids, attention_mask, params, n_passages):
    bsz, total_length = input_ids.shape
    L = total_length // n_passages
    ids = input_ids.reshape(bsz * n_passages, L)
    mask = attention_mask.reshape(bsz * n_passages, L).astype(jnp.float32)
    x = jnp.take(params["embed"], ids, axis=0).astype(jnp.float32)
    pbias = _rel_position_bias(L, params["rel_bias"])

    def one(x1, m1):
        hn = _rms_norm(x1, params["ln1"])
        q, k, v = hn @ params["wq"], hn @ params["wk"], hn @ params["wv"]
        s = q @ k.T + pbias + (1.0 - m1)[None, :] * NEG_INF
        p = jax.nn.softmax(s, axis=-1)
        h = x1 + (p @ v) @ params["wo"]
        hn2 = _rms_norm(h, params["ln2"])
        h = h + jnp.maximum(hn2 @ params["w1"], 0.0) @ params["w2"]
        return _rms_norm(h, params["lnf"])

    out = jax.vmap(one)(x, mask)
    return out.reshape(bsz, n_passages * L, -1)


# ----------------------------------- main -------------------------------------
def init_params(key):
    ks = jax.random.split(key, 10)
    s = 0.02
    return {
        "embed":    jax.random.normal(ks[0], (VOCAB, D_MODEL), jnp.float32) * s,
        "rel_bias": jax.random.normal(ks[1], (2 * PASSAGE_LEN - 1,), jnp.float32) * s,
        "wq":  jax.random.normal(ks[2], (D_MODEL, D_MODEL), jnp.float32) * s,
        "wk":  jax.random.normal(ks[3], (D_MODEL, D_MODEL), jnp.float32) * s,
        "wv":  jax.random.normal(ks[4], (D_MODEL, D_MODEL), jnp.float32) * s,
        "wo":  jax.random.normal(ks[5], (D_MODEL, D_MODEL), jnp.float32) * s,
        "w1":  jax.random.normal(ks[6], (D_MODEL, D_FF), jnp.float32) * s,
        "w2":  jax.random.normal(ks[7], (D_FF, D_MODEL), jnp.float32) * s,
        "ln1": jnp.ones((1, D_MODEL), jnp.float32),
        "ln2": jnp.ones((1, D_MODEL), jnp.float32),
        "lnf": jnp.ones((1, D_MODEL), jnp.float32),
    }


if __name__ == "__main__":
    key = jax.random.PRNGKey(0)
    kp, ki, km = jax.random.split(key, 3)

    params = init_params(kp)

    total_length = N_PASSAGES * PASSAGE_LEN
    input_ids = jax.random.randint(ki, (BSZ, total_length), 0, VOCAB, dtype=jnp.int32)
    # deterministic mask: last 2 tokens of each passage are padding
    per_passage = jnp.concatenate(
        [jnp.ones((PASSAGE_LEN - 2,), jnp.int32), jnp.zeros((2,), jnp.int32)])
    attention_mask = jnp.tile(per_passage, (BSZ, N_PASSAGES))

    out = encoder_wrapper_forward(input_ids, attention_mask, params, N_PASSAGES)
    out = jax.block_until_ready(out)
    assert out.shape == (BSZ, N_PASSAGES * PASSAGE_LEN, D_MODEL), out.shape

    ref = reference_forward(input_ids, attention_mask, params, N_PASSAGES)
    # tolerance accounts for the EUP approximate reciprocal in the softmax
    assert jnp.allclose(out, ref, atol=5e-3, rtol=5e-3), "mismatch vs reference"

    print("KERNEL_OK")
</pallas_src>

<mosaic_0001>
module attributes {stable_mosaic.version = 11 : i64} {
  func.func @fid_passage_encoder_kernel(%arg0: i32, %arg1: memref<1x8x32xf32, #tpu.memory_space<vmem>>, %arg2: memref<1x1x8xf32, #tpu.memory_space<vmem>>, %arg3: memref<8x8xf32, #tpu.memory_space<vmem>>, %arg4: memref<5x32x32xf32, #tpu.memory_space<vmem>>, %arg5: memref<32x64xf32, #tpu.memory_space<vmem>>, %arg6: memref<64x32xf32, #tpu.memory_space<vmem>>, %arg7: memref<1x8x32xf32, #tpu.memory_space<vmem>>) attributes {dimension_semantics = [#tpu.dimension_semantics<parallel>], iteration_bounds = array<i64: 4>, scalar_prefetch = 0 : i64, scratch_operands = 0 : i64, tpu.core_type = #tpu.core_type<tc>, window_params = [{transform_indices = @transform_0, window_bounds = array<i64: 1, 8, 32>}, {transform_indices = @transform_1, window_bounds = array<i64: 1, 1, 8>}, {pipeline_mode = #tpu.pipeline_mode<synchronous>, transform_indices = @transform_2, window_bounds = array<i64: 8, 8>}, {pipeline_mode = #tpu.pipeline_mode<synchronous>, transform_indices = @transform_3, window_bounds = array<i64: 5, 32, 32>}, {pipeline_mode = #tpu.pipeline_mode<synchronous>, transform_indices = @transform_4, window_bounds = array<i64: 32, 64>}, {pipeline_mode = #tpu.pipeline_mode<synchronous>, transform_indices = @transform_5, window_bounds = array<i64: 64, 32>}, {transform_indices = @transform_6, window_bounds = array<i64: 1, 8, 32>}]} {
    %c0 = arith.constant 0 : index
    %c0_0 = arith.constant 0 : index
    %c0_1 = arith.constant 0 : index
    %0 = vector.load %arg1[%c0, %c0_0, %c0_1] : memref<1x8x32xf32, #tpu.memory_space<vmem>>, vector<1x8x32xf32>
    %1 = vector.shape_cast %0 : vector<1x8x32xf32> to vector<8x32xf32>
    %c0_2 = arith.constant 0 : index
    %c0_3 = arith.constant 0 : index
    %c0_4 = arith.constant 0 : index
    %2 = vector.load %arg2[%c0_2, %c0_3, %c0_4] : memref<1x1x8xf32, #tpu.memory_space<vmem>>, vector<1x1x8xf32>
    %3 = vector.shape_cast %2 : vector<1x1x8xf32> to vector<1x8xf32>
    %c0_5 = arith.constant 0 : index
    %c0_6 = arith.constant 0 : index
    %4 = vector.load %arg3[%c0_5, %c0_6] : memref<8x8xf32, #tpu.memory_space<vmem>>, vector<8x8xf32>
    %cst = arith.constant 5.000000e-01 : f32
    %5 = vector.broadcast %cst : f32 to vector<1x8xf32>
    %6 = arith.cmpf ogt, %3, %5 : vector<1x8xf32>
    %cst_7 = arith.constant 0.000000e+00 : f32
    %cst_8 = arith.constant -1.000000e+09 : f32
    %7 = vector.broadcast %cst_7 : f32 to vector<1x8xf32>
    %8 = vector.broadcast %cst_8 : f32 to vector<1x8xf32>
    %9 = arith.select %6, %7, %8 : vector<1x8xi1>, vector<1x8xf32>
    %10 = vector.broadcast %9 : vector<1x8xf32> to vector<8x8xf32>
    %11 = arith.addf %4, %10 : vector<8x8xf32>
    %c4 = arith.constant 4 : index
    %c0_9 = arith.constant 0 : index
    %c0_10 = arith.constant 0 : index
    %12 = vector.load %arg4[%c4, %c0_9, %c0_10] : memref<5x32x32xf32, #tpu.memory_space<vmem>>, vector<1x32x32xf32>
    %13 = vector.shape_cast %12 : vector<1x32x32xf32> to vector<32x32xf32>
    %14 = vector.extract_strided_slice %13 {offsets = [0, 0], sizes = [1, 32], strides = [1, 1]} : vector<32x32xf32> to vector<1x32xf32>
    %15 = arith.mulf %1, %1 : vector<8x32xf32>
    %cst_11 = arith.constant dense<0.000000e+00> : vector<8xf32>
    %16 = vector.multi_reduction <add>, %15, %cst_11 [1] : vector<8x32xf32> to vector<8xf32>
    %17 = vector.shape_cast %16 : vector<8xf32> to vector<8x1xf32>
    %cst_12 = arith.constant 3.200000e+01 : f32
    %18 = vector.broadcast %cst_12 : f32 to vector<8x1xf32>
    %19 = arith.divf %17, %18 : vector<8x1xf32>
    %cst_13 = arith.constant 9.99999997E-7 : f32
    %20 = vector.broadcast %cst_13 : f32 to vector<8x1xf32>
    %21 = arith.addf %19, %20 : vector<8x1xf32>
    %22 = math.rsqrt %21 : vector<8x1xf32>
    %23 = vector.broadcast %22 : vector<8x1xf32> to vector<8x32xf32>
    %24 = arith.mulf %1, %23 : vector<8x32xf32>
    %25 = vector.broadcast %14 : vector<1x32xf32> to vector<8x32xf32>
    %26 = arith.mulf %24, %25 : vector<8x32xf32>
    %c0_14 = arith.constant 0 : index
    %c0_15 = arith.constant 0 : index
    %c0_16 = arith.constant 0 : index
    %27 = vector.load %arg4[%c0_14, %c0_15, %c0_16] : memref<5x32x32xf32, #tpu.memory_space<vmem>>, vector<1x32x32xf32>
    %28 = vector.shape_cast %27 : vector<1x32x32xf32> to vector<32x32xf32>
    %cst_17 = arith.constant dense<0.000000e+00> : vector<8x32xf32>
    %29 = tpu.matmul %26, %28, %cst_17 {dimension_numbers = #tpu.dot_dimension_numbers<[1], [0], [0], [1], [0, 0, 1, 1], [], []>} : vector<8x32xf32>, vector<32x32xf32>, vector<8x32xf32> -> vector<8x32xf32>
    %c1 = arith.constant 1 : index
    %c0_18 = arith.constant 0 : index
    %c0_19 = arith.constant 0 : index
    %30 = vector.load %arg4[%c1, %c0_18, %c0_19] : memref<5x32x32xf32, #tpu.memory_space<vmem>>, vector<1x32x32xf32>
    %31 = vector.shape_cast %30 : vector<1x32x32xf32> to vector<32x32xf32>
    %cst_20 = arith.constant dense<0.000000e+00> : vector<8x32xf32>
    %32 = tpu.matmul %26, %31, %cst_20 {dimension_numbers = #tpu.dot_dimension_numbers<[1], [0], [0], [1], [0, 0, 1, 1], [], []>} : vector<8x32xf32>, vector<32x32xf32>, vector<8x32xf32> -> vector<8x32xf32>
    %c2 = arith.constant 2 : index
    %c0_21 = arith.constant 0 : index
    %c0_22 = arith.constant 0 : index
    %33 = vector.load %arg4[%c2, %c0_21, %c0_22] : memref<5x32x32xf32, #tpu.memory_space<vmem>>, vector<1x32x32xf32>
    %34 = vector.shape_cast %33 : vector<1x32x32xf32> to vector<32x32xf32>
    %cst_23 = arith.constant dense<0.000000e+00> : vector<8x32xf32>
    %35 = tpu.matmul %26, %34, %cst_23 {dimension_numbers = #tpu.dot_dimension_numbers<[1], [0], [0], [1], [0, 0, 1, 1], [], []>} : vector<8x32xf32>, vector<32x32xf32>, vector<8x32xf32> -> vector<8x32xf32>
    %cst_24 = arith.constant dense<0.000000e+00> : vector<8x8xf32>
    %36 = tpu.matmul %29, %32, %cst_24 {dimension_numbers = #tpu.dot_dimension_numbers<[1], [1], [0], [0], [0, 0, 1, 0], [], []>} : vector<8x32xf32>, vector<8x32xf32>, vector<8x8xf32> -> vector<8x8xf32>
    %37 = arith.addf %36, %11 : vector<8x8xf32>
    %cst_25 = arith.constant dense<0xFF800000> : vector<8xf32>
    %38 = vector.multi_reduction <maximumf>, %37, %cst_25 [1] : vector<8x8xf32> to vector<8xf32>
    %39 = vector.shape_cast %38 : vector<8xf32> to vector<8x1xf32>
    %40 = vector.broadcast %39 : vector<8x1xf32> to vector<8x8xf32>
    %41 = arith.subf %37, %40 : vector<8x8xf32>
    %42 = math.exp %41 : vector<8x8xf32>
    %cst_26 = arith.constant dense<0.000000e+00> : vector<8xf32>
    %43 = vector.multi_reduction <add>, %42, %cst_26 [1] : vector<8x8xf32> to vector<8xf32>
    %44 = vector.shape_cast %43 : vector<8xf32> to vector<8x1xf32>
    %45 = tpu.reciprocal %44 {approx = true} : vector<8x1xf32> -> vector<8x1xf32>
    %46 = vector.broadcast %45 : vector<8x1xf32> to vector<8x8xf32>
    %47 = arith.mulf %42, %46 : vector<8x8xf32>
    %cst_27 = arith.constant dense<0.000000e+00> : vector<8x32xf32>
    %48 = tpu.matmul %47, %35, %cst_27 {dimension_numbers = #tpu.dot_dimension_numbers<[1], [0], [0], [1], [0, 0, 1, 1], [], []>} : vector<8x8xf32>, vector<8x32xf32>, vector<8x32xf32> -> vector<8x32xf32>
    %c3 = arith.constant 3 : index
    %c0_28 = arith.constant 0 : index
    %c0_29 = arith.constant 0 : index
    %49 = vector.load %arg4[%c3, %c0_28, %c0_29] : memref<5x32x32xf32, #tpu.memory_space<vmem>>, vector<1x32x32xf32>
    %50 = vector.shape_cast %49 : vector<1x32x32xf32> to vector<32x32xf32>
    %cst_30 = arith.constant dense<0.000000e+00> : vector<8x32xf32>
    %51 = tpu.matmul %48, %50, %cst_30 {dimension_numbers = #tpu.dot_dimension_numbers<[1], [0], [0], [1], [0, 0, 1, 1], [], []>} : vector<8x32xf32>, vector<32x32xf32>, vector<8x32xf32> -> vector<8x32xf32>
    %52 = arith.addf %1, %51 : vector<8x32xf32>
    %53 = vector.extract_strided_slice %13 {offsets = [1, 0], sizes = [1, 32], strides = [1, 1]} : vector<32x32xf32> to vector<1x32xf32>
    %54 = arith.mulf %52, %52 : vector<8x32xf32>
    %cst_31 = arith.constant dense<0.000000e+00> : vector<8xf32>
    %55 = vector.multi_reduction <add>, %54, %cst_31 [1] : vector<8x32xf32> to vector<8xf32>
    %56 = vector.shape_cast %55 : vector<8xf32> to vector<8x1xf32>
    %cst_32 = arith.constant 3.200000e+01 : f32
    %57 = vector.broadcast %cst_32 : f32 to vector<8x1xf32>
    %58 = arith.divf %56, %57 : vector<8x1xf32>
    %cst_33 = arith.constant 9.99999997E-7 : f32
    %59 = vector.broadcast %cst_33 : f32 to vector<8x1xf32>
    %60 = arith.addf %58, %59 : vector<8x1xf32>
    %61 = math.rsqrt %60 : vector<8x1xf32>
    %62 = vector.broadcast %61 : vector<8x1xf32> to vector<8x32xf32>
    %63 = arith.mulf %52, %62 : vector<8x32xf32>
    %64 = vector.broadcast %53 : vector<1x32xf32> to vector<8x32xf32>
    %65 = arith.mulf %63, %64 : vector<8x32xf32>
    %c0_34 = arith.constant 0 : index
    %c0_35 = arith.constant 0 : index
    %66 = vector.load %arg5[%c0_34, %c0_35] : memref<32x64xf32, #tpu.memory_space<vmem>>, vector<32x64xf32>
    %cst_36 = arith.constant dense<0.000000e+00> : vector<8x64xf32>
    %67 = tpu.matmul %65, %66, %cst_36 {dimension_numbers = #tpu.dot_dimension_numbers<[1], [0], [0], [1], [0, 0, 1, 1], [], []>} : vector<8x32xf32>, vector<32x64xf32>, vector<8x64xf32> -> vector<8x64xf32>
    %cst_37 = arith.constant 0.000000e+00 : f32
    %68 = vector.broadcast %cst_37 : f32 to vector<8x64xf32>
    %69 = arith.maximumf %67, %68 : vector<8x64xf32>
    %c0_38 = arith.constant 0 : index
    %c0_39 = arith.constant 0 : index
    %70 = vector.load %arg6[%c0_38, %c0_39] : memref<64x32xf32, #tpu.memory_space<vmem>>, vector<64x32xf32>
    %cst_40 = arith.constant dense<0.000000e+00> : vector<8x32xf32>
    %71 = tpu.matmul %69, %70, %cst_40 {dimension_numbers = #tpu.dot_dimension_numbers<[1], [0], [0], [1], [0, 0, 1, 1], [], []>} : vector<8x64xf32>, vector<64x32xf32>, vector<8x32xf32> -> vector<8x32xf32>
    %72 = arith.addf %52, %71 : vector<8x32xf32>
    %73 = vector.extract_strided_slice %13 {offsets = [2, 0], sizes = [1, 32], strides = [1, 1]} : vector<32x32xf32> to vector<1x32xf32>
    %74 = arith.mulf %72, %72 : vector<8x32xf32>
    %cst_41 = arith.constant dense<0.000000e+00> : vector<8xf32>
    %75 = vector.multi_reduction <add>, %74, %cst_41 [1] : vector<8x32xf32> to vector<8xf32>
    %76 = vector.shape_cast %75 : vector<8xf32> to vector<8x1xf32>
    %cst_42 = arith.constant 3.200000e+01 : f32
    %77 = vector.broadcast %cst_42 : f32 to vector<8x1xf32>
    %78 = arith.divf %76, %77 : vector<8x1xf32>
    %cst_43 = arith.constant 9.99999997E-7 : f32
    %79 = vector.broadcast %cst_43 : f32 to vector<8x1xf32>
    %80 = arith.addf %78, %79 : vector<8x1xf32>
    %81 = math.rsqrt %80 : vector<8x1xf32>
    %82 = vector.broadcast %81 : vector<8x1xf32> to vector<8x32xf32>
    %83 = arith.mulf %72, %82 : vector<8x32xf32>
    %84 = vector.broadcast %73 : vector<1x32xf32> to vector<8x32xf32>
    %85 = arith.mulf %83, %84 : vector<8x32xf32>
    %c0_44 = arith.constant 0 : index
    %c0_45 = arith.constant 0 : index
    %c0_46 = arith.constant 0 : index
    %86 = vector.load %arg7[%c0_44, %c0_45, %c0_46] : memref<1x8x32xf32, #tpu.memory_space<vmem>>, vector<1x8x32xf32>
    %87 = vector.shape_cast %86 : vector<1x8x32xf32> to vector<8x32xf32>
    %88 = vector.shape_cast %85 : vector<8x32xf32> to vector<1x8x32xf32>
    tpu.vector_store %arg7[%c0_44, %c0_45, %c0_46], %88 {strides = array<i32>} : memref<1x8x32xf32, #tpu.memory_space<vmem>>, vector<1x8x32xf32>,
    return
  }
  func.func @transform_0(%arg0: i32) -> (i32, i32, i32) {
    %c0_i32 = arith.constant 0 : i32
    %c0_i32_0 = arith.constant 0 : i32
    %c0_i32_1 = arith.constant 0 : i32
    return %arg0, %c0_i32, %c0_i32_0 : i32, i32, i32
  }
  func.func @transform_1(%arg0: i32) -> (i32, i32, i32) {
    %c0_i32 = arith.constant 0 : i32
    %c0_i32_0 = arith.constant 0 : i32
    %c0_i32_1 = arith.constant 0 : i32
    return %arg0, %c0_i32, %c0_i32_0 : i32, i32, i32
  }
  func.func @transform_2(%arg0: i32) -> (i32, i32) {
    %c0_i32 = arith.constant 0 : i32
    %c0_i32_0 = arith.constant 0 : i32
    %c0_i32_1 = arith.constant 0 : i32
    return %c0_i32, %c0_i32_0 : i32, i32
  }
  func.func @transform_3(%arg0: i32) -> (i32, i32, i32) {
    %c0_i32 = arith.constant 0 : i32
    %c0_i32_0 = arith.constant 0 : i32
    %c0_i32_1 = arith.constant 0 : i32
    %c0_i32_2 = arith.constant 0 : i32
    return %c0_i32, %c0_i32_0, %c0_i32_1 : i32, i32, i32
  }
  func.func @transform_4(%arg0: i32) -> (i32, i32) {
    %c0_i32 = arith.constant 0 : i32
    %c0_i32_0 = arith.constant 0 : i32
    %c0_i32_1 = arith.constant 0 : i32
    return %c0_i32, %c0_i32_0 : i32, i32
  }
  func.func @transform_5(%arg0: i32) -> (i32, i32) {
    %c0_i32 = arith.constant 0 : i32
    %c0_i32_0 = arith.constant 0 : i32
    %c0_i32_1 = arith.constant 0 : i32
    return %c0_i32, %c0_i32_0 : i32, i32
  }
  func.func @transform_6(%arg0: i32) -> (i32, i32, i32) {
    %c0_i32 = arith.constant 0 : i32
    %c0_i32_0 = arith.constant 0 : i32
    %c0_i32_1 = arith.constant 0 : i32
    return %arg0, %c0_i32, %c0_i32_0 : i32, i32, i32
  }
}

</mosaic_0001>

<llo_original>
// kernel: encoder_wrapper_forward.1
$region0: #{encoder_wrapper_forward.1}
  #allocation0 [shape = 'u32[]', space=smem, size = 0x4, offset = 0x4, fixed_abs, tag = 'smem constant byte address 0x4 - core index']
  #allocation1 [shape = 'u32[144,128]{1,0:T(1,128)}', space=vmem, size = 0x12000, scoped, tag = 'internal scratch']
  %s0 = inlined_call_operand.vmem [shape: f32[4,8,32], index: 0, kind: input, shape index: {}]
  %s1 = inlined_call_operand.vmem [shape: f32[4,1,8], index: 1, kind: input, shape index: {}]
  %s2 = inlined_call_operand.vmem [shape: f32[8,8], index: 2, kind: input, shape index: {}]
  %s3 = inlined_call_operand.vmem [shape: f32[5,32,32], index: 3, kind: input, shape index: {}]
  %s4 = inlined_call_operand.vmem [shape: f32[32,64], index: 4, kind: input, shape index: {}]
  %s5 = inlined_call_operand.vmem [shape: f32[64,32], index: 5, kind: input, shape index: {}]
  %s6 = inlined_call_operand.hbm [shape: f32[4,8,32], index: 6, kind: output, shape index: {}]
  %s7 = sld [smem:[#allocation0]]
  $region57: #{encoder_wrapper_forward.1} parent=0
    _
  %s9 = ssub.s32 1, %s7
  %s10 = scalar_select 0, %s9, %s7
  $region1: #{encoder_wrapper_forward.1} parent=0
    #allocation2 [shape = 'u8[8192]{0}', space=vmem, size = 0x2000, scoped, tag = 'output window, operand 0']
    #allocation3 [shape = 's32[2]{0}', space=sflag, size = 0x8, scoped, tag = 'scoped memory for encoder_wrapper_forward.1']
    %11 = vsyncpa [#allocation3], 0
    %s12 = scalar_lea.sflag [#allocation3], 1
    %13 = vsyncpa %s12, 0
    loop: start=0, step=1, limit=6
    $region2: #{encoder_wrapper_forward.1} parent=1 // loop_pre_header
      _
    $region3: #{encoder_wrapper_forward.1} parent=1 // loop_header
      %s15 = sphi 0, %s19
      %p16 = scmp.ge.s32.totalorder %s15, 6
      %s25 = sphi 0, %s27
      %s28 = sphi 0, %s25
      %s29 = sphi 0, %s28
      %s45 = sphi 0, %s29
      %s51 = sphi 0, %s53
      %s54 = sphi 0, %s51
      %s55 = sphi 0, %s54
      %s71 = sphi 0, %s55
      %s75 = sphi 0, %s75
      %s77 = sphi 0, %s75
      %s78 = sphi 0, %s77
      %s92 = sphi 0, %s78
      %s96 = sphi 0, %s96
      %s98 = sphi 0, %s96
      %s99 = sphi 0, %s98
      %s113 = sphi 0, %s99
      %s117 = sphi 0, %s117
      %s119 = sphi 0, %s117
      %s120 = sphi 0, %s119
      %s134 = sphi 0, %s120
      %s138 = sphi 0, %s138
      %s140 = sphi 0, %s138
      %s141 = sphi 0, %s140
      %s155 = sphi 0, %s141
      %s161 = sphi 0, %s163
      %s164 = sphi 0, %s161
      %s165 = sphi 0, %s164
      %s181 = sphi 0, %s165
    $region4: #{encoder_wrapper_forward.1} parent=1 // loop_header_branch
      %18 = sbr.rel (%p16) target = $region8
    $region5: #{encoder_wrapper_forward.1} parent=1 // loop_body
      %s20 = ssub.s32 %s15, 1
      %s21 = ssub.s32 %s15, 2
      %s22 = sadd.s32 %s15, 1
      %s23 = ssub.s32 %s15, %s22
      %p24 = scmp.eq.s32.totalorder %s23, 0
      %s26 = sadd.s32 %s25, 1
      %s27 = scalar_select %p24, %s25, %s26
      %p30 = pneg %p24
      %p31 = scmp.eq.s32.totalorder %s15, 3
      %p32 = por %p30, %p31
      %p33 = scmp.ne.s32.totalorder %s25, %s28
      %p34 = scmp.eq.s32.totalorder %s15, 0
      %p35 = por %p33, %p34
      %p36 = scmp.ne.s32.totalorder %s25, %s28
      %p37 = scmp.eq.s32.totalorder %s20, 3
      %p38 = por %p36, %p37
      %p39 = scmp.ne.s32.totalorder %s28, %s29
      %p40 = scmp.eq.s32.totalorder %s20, 0
      %p41 = por %p39, %p40
      %p42 = scmp.ne.s32.totalorder %s28, %s29
      %p43 = scmp.eq.s32.totalorder %s21, 3
      %p44 = por %p42, %p43
      %p46 = scmp.ne.s32.totalorder %s29, %s45
      %p47 = scmp.eq.s32.totalorder %s21, 0
      %p48 = por %p46, %p47
      %s49 = ssub.s32 %s15, %s22
      %p50 = scmp.eq.s32.totalorder %s49, 0
      %s52 = sadd.s32 %s51, 1
      %s53 = scalar_select %p50, %s51, %s52
      %p56 = pneg %p50
      %p57 = scmp.eq.s32.totalorder %s15, 3
      %p58 = por %p56, %p57
      %p59 = scmp.ne.s32.totalorder %s51, %s54
      %p60 = scmp.eq.s32.totalorder %s15, 0
      %p61 = por %p59, %p60
      %p62 = scmp.ne.s32.totalorder %s51, %s54
      %p63 = scmp.eq.s32.totalorder %s20, 3
      %p64 = por %p62, %p63
      %p65 = scmp.ne.s32.totalorder %s54, %s55
      %p66 = scmp.eq.s32.totalorder %s20, 0
      %p67 = por %p65, %p66
      %p68 = scmp.ne.s32.totalorder %s54, %s55
      %p69 = scmp.eq.s32.totalorder %s21, 3
      %p70 = por %p68, %p69
      %p72 = scmp.ne.s32.totalorder %s55, %s71
      %p73 = scmp.eq.s32.totalorder %s21, 0
      %p74 = por %p72, %p73
      %s76 = sadd.s32 %s75, 1
      %p79 = scmp.eq.s32.totalorder %s15, 3
      %p80 = scmp.ne.s32.totalorder %s75, %s77
      %p81 = scmp.eq.s32.totalorder %s15, 0
      %p82 = por %p80, %p81
      %p83 = scmp.ne.s32.totalorder %s75, %s77
      %p84 = scmp.eq.s32.totalorder %s20, 3
      %p85 = por %p83, %p84
      %p86 = scmp.ne.s32.totalorder %s77, %s78
      %p87 = scmp.eq.s32.totalorder %s20, 0
      %p88 = por %p86, %p87
      %p89 = scmp.ne.s32.totalorder %s77, %s78
      %p90 = scmp.eq.s32.totalorder %s21, 3
      %p91 = por %p89, %p90
      %p93 = scmp.ne.s32.totalorder %s78, %s92
      %p94 = scmp.eq.s32.totalorder %s21, 0
      %p95 = por %p93, %p94
      %s97 = sadd.s32 %s96, 1
      %p100 = scmp.eq.s32.totalorder %s15, 3
      %p101 = scmp.ne.s32.totalorder %s96, %s98
      %p102 = scmp.eq.s32.totalorder %s15, 0
      %p103 = por %p101, %p102
      %p104 = scmp.ne.s32.totalorder %s96, %s98
      %p105 = scmp.eq.s32.totalorder %s20, 3
      %p106 = por %p104, %p105
      %p107 = scmp.ne.s32.totalorder %s98, %s99
      %p108 = scmp.eq.s32.totalorder %s20, 0
      %p109 = por %p107, %p108
      %p110 = scmp.ne.s32.totalorder %s98, %s99
      %p111 = scmp.eq.s32.totalorder %s21, 3
      %p112 = por %p110, %p111
      %p114 = scmp.ne.s32.totalorder %s99, %s113
      %p115 = scmp.eq.s32.totalorder %s21, 0
      %p116 = por %p114, %p115
      %s118 = sadd.s32 %s117, 1
      %p121 = scmp.eq.s32.totalorder %s15, 3
      %p122 = scmp.ne.s32.totalorder %s117, %s119
      %p123 = scmp.eq.s32.totalorder %s15, 0
      %p124 = por %p122, %p123
      %p125 = scmp.ne.s32.totalorder %s117, %s119
      %p126 = scmp.eq.s32.totalorder %s20, 3
      %p127 = por %p125, %p126
      %p128 = scmp.ne.s32.totalorder %s119, %s120
      %p129 = scmp.eq.s32.totalorder %s20, 0
      %p130 = por %p128, %p129
      %p131 = scmp.ne.s32.totalorder %s119, %s120
      %p132 = scmp.eq.s32.totalorder %s21, 3
      %p133 = por %p131, %p132
      %p135 = scmp.ne.s32.totalorder %s120, %s134
      %p136 = scmp.eq.s32.totalorder %s21, 0
      %p137 = por %p135, %p136
      %s139 = sadd.s32 %s138, 1
      %p142 = scmp.eq.s32.totalorder %s15, 3
      %p143 = scmp.ne.s32.totalorder %s138, %s140
      %p144 = scmp.eq.s32.totalorder %s15, 0
      %p145 = por %p143, %p144
      %p146 = scmp.ne.s32.totalorder %s138, %s140
      %p147 = scmp.eq.s32.totalorder %s20, 3
      %p148 = por %p146, %p147
      %p149 = scmp.ne.s32.totalorder %s140, %s141
      %p150 = scmp.eq.s32.totalorder %s20, 0
      %p151 = por %p149, %p150
      %p152 = scmp.ne.s32.totalorder %s140, %s141
      %p153 = scmp.eq.s32.totalorder %s21, 3
      %p154 = por %p152, %p153
      %p156 = scmp.ne.s32.totalorder %s141, %s155
      %p157 = scmp.eq.s32.totalorder %s21, 0
      %p158 = por %p156, %p157
      %s159 = ssub.s32 %s15, %s22
      %p160 = scmp.eq.s32.totalorder %s159, 0
      %s162 = sadd.s32 %s161, 1
      %s163 = scalar_select %p160, %s161, %s162
      %p166 = pneg %p160
      %p167 = scmp.eq.s32.totalorder %s15, 3
      %p168 = por %p166, %p167
      %p169 = scmp.ne.s32.totalorder %s161, %s164
      %p170 = scmp.eq.s32.totalorder %s15, 0
      %p171 = por %p169, %p170
      %p172 = scmp.ne.s32.totalorder %s161, %s164
      %p173 = scmp.eq.s32.totalorder %s20, 3
      %p174 = por %p172, %p173
      %p175 = scmp.ne.s32.totalorder %s164, %s165
      %p176 = scmp.eq.s32.totalorder %s20, 0
      %p177 = por %p175, %p176
      %p178 = scmp.ne.s32.totalorder %s164, %s165
      %p179 = scmp.eq.s32.totalorder %s21, 3
      %p180 = por %p178, %p179
      %p182 = scmp.ne.s32.totalorder %s165, %s181
      %p183 = scmp.eq.s32.totalorder %s21, 0
      %p184 = por %p182, %p183
      %p185 = scmp.le.s32.totalorder 1, %s15
      %p186 = scmp.lt.s32.totalorder %s15, 5
      %p187 = pnand %p185, %p186
      %p188 = pneg %p187
      // Predicated region
      $region9: #{encoder_wrapper_forward.1} parent=5 // pred_check
        _
      $region10: #{encoder_wrapper_forward.1} parent=5 // pred_check_branch
        %190 = sbr.rel (%p187) target = $region12
      $region11: #{encoder_wrapper_forward.1} parent=5 // pred_region
        %s191 = ssub.s32 %s15, 1
        // Predicated region
        $region13: #{encoder_wrapper_forward.1} parent=11 // pred_check
          %p192 = pneg %p88
        $region14: #{encoder_wrapper_forward.1} parent=11 // pred_check_branch
          %194 = sbr.rel (%p192) target = $region16
        $region15: #{encoder_wrapper_forward.1} parent=11 // pred_region
          _
        $region16: #{encoder_wrapper_forward.1} parent=11 // pred_fallthru
          _
        // Predicated region
        $region17: #{encoder_wrapper_forward.1} parent=11 // pred_check
          %p195 = pneg %p109
        $region18: #{encoder_wrapper_forward.1} parent=11 // pred_check_branch
          %197 = sbr.rel (%p195) target = $region20
        $region19: #{encoder_wrapper_forward.1} parent=11 // pred_region
          _
        $region20: #{encoder_wrapper_forward.1} parent=11 // pred_fallthru
          _
        // Predicated region
        $region21: #{encoder_wrapper_forward.1} parent=11 // pred_check
          %p198 = pneg %p130
        $region22: #{encoder_wrapper_forward.1} parent=11 // pred_check_branch
          %200 = sbr.rel (%p198) target = $region24
        $region23: #{encoder_wrapper_forward.1} parent=11 // pred_region
          _
        $region24: #{encoder_wrapper_forward.1} parent=11 // pred_fallthru
          _
        // Predicated region
        $region25: #{encoder_wrapper_forward.1} parent=11 // pred_check
          %p201 = pneg %p151
        $region26: #{encoder_wrapper_forward.1} parent=11 // pred_check_branch
          %203 = sbr.rel (%p201) target = $region28
        $region27: #{encoder_wrapper_forward.1} parent=11 // pred_region
          _
        $region28: #{encoder_wrapper_forward.1} parent=11 // pred_fallthru
          _
      $region12: #{encoder_wrapper_forward.1} parent=5 // pred_fallthru
        _
      %p204 = scmp.lt.s32.totalorder %s15, 4
      // Predicated region
      $region29: #{encoder_wrapper_forward.1} parent=5 // pred_check
        %p205 = pneg %p204
      $region30: #{encoder_wrapper_forward.1} parent=5 // pred_check_branch
        %207 = sbr.rel (%p205) target = $region32
      $region31: #{encoder_wrapper_forward.1} parent=5 // pred_region
        // Predicated region
        $region33: #{encoder_wrapper_forward.1} parent=31 // pred_check
          %p208 = pneg %p35
        $region34: #{encoder_wrapper_forward.1} parent=31 // pred_check_branch
          %210 = sbr.rel (%p208) target = $region36
        $region35: #{encoder_wrapper_forward.1} parent=31 // pred_region
          %p211 = scmp.lt.s32.totalorder %s15, 3
          %s212 = scalar_select %p211, %s15, 3
          %s213 = smul.addr %s212, 8
          %s214 = scalar_lea.vmem %s0, %s213
        $region36: #{encoder_wrapper_forward.1} parent=31 // pred_fallthru
          _
        // Predicated region
        $region37: #{encoder_wrapper_forward.1} parent=31 // pred_check
          %p215 = pneg %p61
        $region38: #{encoder_wrapper_forward.1} parent=31 // pred_check_branch
          %217 = sbr.rel (%p215) target = $region40
        $region39: #{encoder_wrapper_forward.1} parent=31 // pred_region
          %p218 = scmp.lt.s32.totalorder %s15, 3
          %s219 = scalar_select %p218, %s15, 3
          %s220 = scalar_lea.vmem %s1, %s219
        $region40: #{encoder_wrapper_forward.1} parent=31 // pred_fallthru
          _
      $region32: #{encoder_wrapper_forward.1} parent=5 // pred_fallthru
        _
      %p221 = scmp.le.s32.totalorder 1, %s15
      %p222 = scmp.lt.s32.totalorder %s15, 5
      %p223 = pnand %p221, %p222
      %p224 = pneg %p223
      // Predicated region
      $region41: #{encoder_wrapper_forward.1} parent=5 // pred_check
        _
      $region42: #{encoder_wrapper_forward.1} parent=5 // pred_check_branch
        %226 = sbr.rel (%p223) target = $region44
      $region43: #{encoder_wrapper_forward.1} parent=5 // pred_region
        %s227 = ssub.s32 %s15, 1
        %p228 = scmp.lt.s32.totalorder %s20, 3
        %s229 = scalar_select %p228, %s20, 3
        %s230 = smul.addr %s229, 8
        %s231 = scalar_lea.vmem %s0, %s230
        %p232 = pneg %p41
        %p233 = pneg %p38
        %p234 = scmp.lt.s32.totalorder %s20, 3
        %s235 = scalar_select %p234, %s20, 3
        %s236 = scalar_lea.vmem %s1, %s235
        %p237 = pneg %p67
        %p238 = pneg %p64
        %p239 = pneg %p88
        %p240 = pneg %p85
        %p241 = pneg %p109
        %p242 = pneg %p106
        %p243 = pneg %p130
        %p244 = pneg %p127
        %p245 = pneg %p151
        %p246 = pneg %p148
        %p247 = pneg %p177
        %p248 = pneg %p174
        %s249 = sand.u32 %s164, 1
        %s250 = scalar_lea.sflag [#allocation3], %s249
        %s251 = sand.u32 %s164, 1
        %s252 = smul.addr %s251, 8
        %s253 = scalar_lea.vmem [#allocation2], %s252
        %p254 = scmp.lt.s32.totalorder %s20, 3
        %s255 = scalar_select %p254, %s20, 3
        %s256 = smul.addr %s255, 8
        %s257 = scalar_lea.vmem %s0, %s256
        %p258 = scmp.lt.s32.totalorder %s20, 3
        %s259 = scalar_select %p258, %s20, 3
        %s260 = scalar_lea.vmem %s1, %s259
        %v261 = vld [vmem:[%s257] sm:$0xff]
        %v262 = vld [vmem:[%s260] sm:$0x1]
        %v263 = vld [vmem:[%s2] sm:$0xff]
        %vm264 = vcmp.gt.f32.partialorder %v262, 0.5
        %v265 = vsel %vm264, 0.0, -1e+09
        %v267 = vlaneseq
        %v268 = vshrl.u32 %v267, 7
        %v269 = vsub.s32 0, %v268
        %v270 = vrot.slane %v265, %v269
        %v272 = vadd.f32 %v263, %v270
        %s273 = scalar_lea.vmem %s3, 128
        %v274 = vld [vmem:[%s273] sm:$0xff]
        %v275 = vmul.f32 %v261, %v261
        %vm276 = vcmask 261120
        %v277 = vsel %vm276, %v275, 0.0
        %278 = vadd.xlane.f32.xlu0 %v277
        %v279 = vpop.xlane.xlu0 %278
        %v280 = vrcp.pop 32.0
        %v281 = vmul.f32 %v279, %v280
        %v282 = vadd.f32 %v281, 1e-06
        %v283 = vrsqrt.pop %v282
        %v284 = vmul.f32 %v261, %v283
        %v285 = vlaneseq
        %v286 = vshrl.u32 %v285, 7
        %v287 = vsub.s32 0, %v286
        %v288 = vrot.slane %v274, %v287
        %v289 = vmul.f32 %v284, %v288
        %v290 = vld [vmem:[%s3] sm:$0xff]
        %v291 = vld [vmem:[%s3 + $0x8] sm:$0xff]
        %v292 = vld [vmem:[%s3 + $0x10] sm:$0xff]
        %v293 = vld [vmem:[%s3 + $0x18] sm:$0xff]
        %v295 = vsel %vm276, %v289, 0
        %297 = vmatprep.subr.mxu0 0.0
        %298 = vmatpush1.msra.mxu0 %v290
        %299 = vmatprep.subr.mxu0 0.0
        %300 = vmatpush1.msra.mxu0 %v291
        %301 = vmatprep.subr.mxu0 0.0
        %302 = vmatpush1.msra.mxu0 %v292
        %303 = vmatprep.subr.mxu0 0.0
        %304 = vmatpush1.msra.mxu0 %v293
        %305 = vmatprep.subr.mxu0 0.0
        %306 = vmatpush1.msra.mxu0 0.0
        %307 = vmatprep.subr.mxu0 0.0
        %308 = vmatpush1.msra.mxu0 0.0
        %309 = vmatprep.subr.mxu0 0.0
        %310 = vmatpush1.msra.mxu0 0.0
        %311 = vmatprep.subr.mxu0 0.0
        %312 = vmatpush1.msra.mxu0 0.0
        %313 = vmatprep.subr.mxu0 0.0
        %314 = vmatpush1.msra.mxu0 0.0
        %315 = vmatprep.subr.mxu0 0.0
        %316 = vmatpush1.msra.mxu0 0.0
        %317 = vmatprep.subr.mxu0 0.0
        %318 = vmatpush1.msra.mxu0 0.0
        %319 = vmatprep.subr.mxu0 0.0
        %320 = vmatpush1.msra.mxu0 0.0
        %321 = vmatprep.subr.mxu0 0.0
        %322 = vmatpush1.msra.mxu0 0.0
        %323 = vmatprep.subr.mxu0 0.0
        %324 = vmatpush1.msra.mxu0 0.0
        %325 = vmatprep.subr.mxu0 0.0
        %326 = vmatpush1.msra.mxu0 0.0
        %327 = vmatprep.subr.mxu0 0.0
        %328 = vmatpush1.msra.mxu0 0.0
        %329 = vmatprep.subr.mxu0 0.0
        %330 = vmatpush1.msra.mxu0 0.0
        %331 = vmatprep.subr.mxu0 0.0
        %332 = vmatpush1.msra.mxu0 0.0
        %333 = vmatprep.subr.mxu0 0.0
        %334 = vmatpush1.msra.mxu0 0.0
        %335 = vmatprep.subr.mxu0 0.0
        %336 = vmatpush1.msra.mxu0 0.0
        %337 = vmatprep.subr.mxu0 0.0
        %338 = vmatpush1.msra.mxu0 0.0
        %339 = vmatprep.subr.mxu0 0.0
        %340 = vmatpush1.msra.mxu0 0.0
        %341 = vmatprep.subr.mxu0 0.0
        %342 = vmatpush1.msra.mxu0 0.0
        %343 = vmatprep.subr.mxu0 0.0
        %344 = vmatpush1.msra.mxu0 0.0
        %345 = vmatprep.subr.mxu0 0.0
        %346 = vmatpush1.msra.mxu0 0.0
        %347 = vmatprep.subr.mxu0 0.0
        %348 = vmatpush1.msra.mxu0 0.0
        %349 = vmatprep.subr.mxu0 0.0
        %350 = vmatpush1.msra.mxu0 0.0
        %351 = vmatprep.subr.mxu0 0.0
        %352 = vmatpush1.msra.mxu0 0.0
        %353 = vmatprep.subr.mxu0 0.0
        %354 = vmatpush1.msra.mxu0 0.0
        %355 = vmatprep.subr.mxu0 0.0
        %356 = vmatpush1.msra.mxu0 0.0
        %357 = vmatprep.subr.mxu0 0.0
        %358 = vmatpush1.msra.mxu0 0.0
        %359 = vmatprep.subr.mxu0 0.0
        %360 = vmatpush1.msra.mxu0 0.0
        %361 = vmatprep.mubr.f32.mxu0 0.0
        %362 = vmatmul.mubr.f32.gmra.mrb[0].mxu0 %v295
        %v363 = vpop.f32.mrb[0].mxu0
        %v364 = vadd.f32 0.0, %v363
        %v365 = vpop.f32.mrb[0].mxu0
        %366 = vdwg.mxu0
        %s367 = scalar_lea.vmem %s3, 32
        %v368 = vld [vmem:[%s367] sm:$0xff]
        %v369 = vld [vmem:[%s367 + $0x8] sm:$0xff]
        %v370 = vld [vmem:[%s367 + $0x10] sm:$0xff]
        %v371 = vld [vmem:[%s367 + $0x18] sm:$0xff]
        %372 = vmatprep.subr.mxu0 0.0
        %373 = vmatpush1.msra.mxu0 %v368
        %374 = vmatprep.subr.mxu0 0.0
        %375 = vmatpush1.msra.mxu0 %v369
        %376 = vmatprep.subr.mxu0 0.0
        %377 = vmatpush1.msra.mxu0 %v370
        %378 = vmatprep.subr.mxu0 0.0
        %379 = vmatpush1.msra.mxu0 %v371
        %380 = vmatprep.subr.mxu0 0.0
        %381 = vmatpush1.msra.mxu0 0.0
        %382 = vmatprep.subr.mxu0 0.0
        %383 = vmatpush1.msra.mxu0 0.0
        %384 = vmatprep.subr.mxu0 0.0
        %385 = vmatpush1.msra.mxu0 0.0
        %386 = vmatprep.subr.mxu0 0.0
        %387 = vmatpush1.msra.mxu0 0.0
        %388 = vmatprep.subr.mxu0 0.0
        %389 = vmatpush1.msra.mxu0 0.0
        %390 = vmatprep.subr.mxu0 0.0
        %391 = vmatpush1.msra.mxu0 0.0
        %392 = vmatprep.subr.mxu0 0.0
        %393 = vmatpush1.msra.mxu0 0.0
        %394 = vmatprep.subr.mxu0 0.0
        %395 = vmatpush1.msra.mxu0 0.0
        %396 = vmatprep.subr.mxu0 0.0
        %397 = vmatpush1.msra.mxu0 0.0
        %398 = vmatprep.subr.mxu0 0.0
        %399 = vmatpush1.msra.mxu0 0.0
        %400 = vmatprep.subr.mxu0 0.0
        %401 = vmatpush1.msra.mxu0 0.0
        %402 = vmatprep.subr.mxu0 0.0
        %403 = vmatpush1.msra.mxu0 0.0
        %404 = vmatprep.subr.mxu0 0.0
        %405 = vmatpush1.msra.mxu0 0.0
        %406 = vmatprep.subr.mxu0 0.0
        %407 = vmatpush1.msra.mxu0 0.0
        %408 = vmatprep.subr.mxu0 0.0
        %409 = vmatpush1.msra.mxu0 0.0
        %410 = vmatprep.subr.mxu0 0.0
        %411 = vmatpush1.msra.mxu0 0.0
        %412 = vmatprep.subr.mxu0 0.0
        %413 = vmatpush1.msra.mxu0 0.0
        %414 = vmatprep.subr.mxu0 0.0
        %415 = vmatpush1.msra.mxu0 0.0
        %416 = vmatprep.subr.mxu0 0.0
        %417 = vmatpush1.msra.mxu0 0.0
        %418 = vmatprep.subr.mxu0 0.0
        %419 = vmatpush1.msra.mxu0 0.0
        %420 = vmatprep.subr.mxu0 0.0
        %421 = vmatpush1.msra.mxu0 0.0
        %422 = vmatprep.subr.mxu0 0.0
        %423 = vmatpush1.msra.mxu0 0.0
        %424 = vmatprep.subr.mxu0 0.0
        %425 = vmatpush1.msra.mxu0 0.0
        %426 = vmatprep.subr.mxu0 0.0
        %427 = vmatpush1.msra.mxu0 0.0
        %428 = vmatprep.subr.mxu0 0.0
        %429 = vmatpush1.msra.mxu0 0.0
        %430 = vmatprep.subr.mxu0 0.0
        %431 = vmatpush1.msra.mxu0 0.0
        %432 = vmatprep.subr.mxu0 0.0
        %433 = vmatpush1.msra.mxu0 0.0
        %434 = vmatprep.subr.mxu0 0.0
        %435 = vmatpush1.msra.mxu0 0.0
        %436 = vmatprep.mubr.f32.mxu0 0.0
        %437 = vmatmul.mubr.f32.gmra.mrb[0].mxu0 %v295
        %v438 = vpop.f32.mrb[0].mxu0
        %v439 = vadd.f32 0.0, %v438
        %v440 = vpop.f32.mrb[0].mxu0
        %441 = vdwg.mxu0
        %s442 = scalar_lea.vmem %s3, 64
        %v443 = vld [vmem:[%s442] sm:$0xff]
        %v444 = vld [vmem:[%s442 + $0x8] sm:$0xff]
        %v445 = vld [vmem:[%s442 + $0x10] sm:$0xff]
        %v446 = vld [vmem:[%s442 + $0x18] sm:$0xff]
        %447 = vmatprep.subr.mxu0 0.0
        %448 = vmatpush1.msra.mxu0 %v443
        %449 = vmatprep.subr.mxu0 0.0
        %450 = vmatpush1.msra.mxu0 %v444
        %451 = vmatprep.subr.mxu0 0.0
        %452 = vmatpush1.msra.mxu0 %v445
        %453 = vmatprep.subr.mxu0 0.0
        %454 = vmatpush1.msra.mxu0 %v446
        %455 = vmatprep.subr.mxu0 0.0
        %456 = vmatpush1.msra.mxu0 0.0
        %457 = vmatprep.subr.mxu0 0.0
        %458 = vmatpush1.msra.mxu0 0.0
        %459 = vmatprep.subr.mxu0 0.0
        %460 = vmatpush1.msra.mxu0 0.0
        %461 = vmatprep.subr.mxu0 0.0
        %462 = vmatpush1.msra.mxu0 0.0
        %463 = vmatprep.subr.mxu0 0.0
        %464 = vmatpush1.msra.mxu0 0.0
        %465 = vmatprep.subr.mxu0 0.0
        %466 = vmatpush1.msra.mxu0 0.0
        %467 = vmatprep.subr.mxu0 0.0
        %468 = vmatpush1.msra.mxu0 0.0
        %469 = vmatprep.subr.mxu0 0.0
        %470 = vmatpush1.msra.mxu0 0.0
        %471 = vmatprep.subr.mxu0 0.0
        %472 = vmatpush1.msra.mxu0 0.0
        %473 = vmatprep.subr.mxu0 0.0
        %474 = vmatpush1.msra.mxu0 0.0
        %475 = vmatprep.subr.mxu0 0.0
        %476 = vmatpush1.msra.mxu0 0.0
        %477 = vmatprep.subr.mxu0 0.0
        %478 = vmatpush1.msra.mxu0 0.0
        %479 = vmatprep.subr.mxu0 0.0
        %480 = vmatpush1.msra.mxu0 0.0
        %481 = vmatprep.subr.mxu0 0.0
        %482 = vmatpush1.msra.mxu0 0.0
        %483 = vmatprep.subr.mxu0 0.0
        %484 = vmatpush1.msra.mxu0 0.0
        %485 = vmatprep.subr.mxu0 0.0
        %486 = vmatpush1.msra.mxu0 0.0
        %487 = vmatprep.subr.mxu0 0.0
        %488 = vmatpush1.msra.mxu0 0.0
        %489 = vmatprep.subr.mxu0 0.0
        %490 = vmatpush1.msra.mxu0 0.0
        %491 = vmatprep.subr.mxu0 0.0
        %492 = vmatpush1.msra.mxu0 0.0
        %493 = vmatprep.subr.mxu0 0.0
        %494 = vmatpush1.msra.mxu0 0.0
        %495 = vmatprep.subr.mxu0 0.0
        %496 = vmatpush1.msra.mxu0 0.0
        %497 = vmatprep.subr.mxu0 0.0
        %498 = vmatpush1.msra.mxu0 0.0
        %499 = vmatprep.subr.mxu0 0.0
        %500 = vmatpush1.msra.mxu0 0.0
        %501 = vmatprep.subr.mxu0 0.0
        %502 = vmatpush1.msra.mxu0 0.0
        %503 = vmatprep.subr.mxu0 0.0
        %504 = vmatpush1.msra.mxu0 0.0
        %505 = vmatprep.subr.mxu0 0.0
        %506 = vmatpush1.msra.mxu0 0.0
        %507 = vmatprep.subr.mxu0 0.0
        %508 = vmatpush1.msra.mxu0 0.0
        %509 = vmatprep.subr.mxu0 0.0
        %510 = vmatpush1.msra.mxu0 0.0
        %511 = vmatprep.mubr.f32.mxu0 0.0
        %512 = vmatmul.mubr.f32.gmra.mrb[0].mxu0 %v295
        %v513 = vpop.f32.mrb[0].mxu0
        %v514 = vadd.f32 0.0, %v513
        %v515 = vpop.f32.mrb[0].mxu0
        %516 = vdwg.mxu0
        %v518 = vsel %vm276, %v364, 0
        %v521 = vsel %vm276, %v439, 0
        %523 = vmatprep.subr.mxu0 0.0
        %524 = vmatpush1.xpose.msra.mxu0 %v521
        %525 = vmatprep.subr.mxu0 0.0
        %526 = vmatpush1.xpose.msra.mxu0 0.0
        %527 = vmatprep.subr.mxu0 0.0
        %528 = vmatpush1.xpose.msra.mxu0 0.0
        %529 = vmatprep.subr.mxu0 0.0
        %530 = vmatpush1.xpose.msra.mxu0 0.0
        %531 = vmatprep.subr.mxu0 0.0
        %532 = vmatpush1.xpose.msra.mxu0 0.0
        %533 = vmatprep.subr.mxu0 0.0
        %534 = vmatpush1.xpose.msra.mxu0 0.0
        %535 = vmatprep.subr.mxu0 0.0
        %536 = vmatpush1.xpose.msra.mxu0 0.0
        %537 = vmatprep.subr.mxu0 0.0
        %538 = vmatpush1.xpose.msra.mxu0 0.0
        %539 = vmatprep.subr.mxu0 0.0
        %540 = vmatpush1.xpose.msra.mxu0 0.0
        %541 = vmatprep.subr.mxu0 0.0
        %542 = vmatpush1.xpose.msra.mxu0 0.0
        %543 = vmatprep.subr.mxu0 0.0
        %544 = vmatpush1.xpose.msra.mxu0 0.0
        %545 = vmatprep.subr.mxu0 0.0
        %546 = vmatpush1.xpose.msra.mxu0 0.0
        %547 = vmatprep.subr.mxu0 0.0
        %548 = vmatpush1.xpose.msra.mxu0 0.0
        %549 = vmatprep.subr.mxu0 0.0
        %550 = vmatpush1.xpose.msra.mxu0 0.0
        %551 = vmatprep.subr.mxu0 0.0
        %552 = vmatpush1.xpose.msra.mxu0 0.0
        %553 = vmatprep.subr.mxu0 0.0
        %554 = vmatpush1.xpose.msra.mxu0 0.0
        %555 = vmatprep.subr.mxu0 0.0
        %556 = vmatpush1.xpose.msra.mxu0 0.0
        %557 = vmatprep.subr.mxu0 0.0
        %558 = vmatpush1.xpose.msra.mxu0 0.0
        %559 = vmatprep.subr.mxu0 0.0
        %560 = vmatpush1.xpose.msra.mxu0 0.0
        %561 = vmatprep.subr.mxu0 0.0
        %562 = vmatpush1.xpose.msra.mxu0 0.0
        %563 = vmatprep.subr.mxu0 0.0
        %564 = vmatpush1.xpose.msra.mxu0 0.0
        %565 = vmatprep.subr.mxu0 0.0
        %566 = vmatpush1.xpose.msra.mxu0 0.0
        %567 = vmatprep.subr.mxu0 0.0
        %568 = vmatpush1.xpose.msra.mxu0 0.0
        %569 = vmatprep.subr.mxu0 0.0
        %570 = vmatpush1.xpose.msra.mxu0 0.0
        %571 = vmatprep.subr.mxu0 0.0
        %572 = vmatpush1.xpose.msra.mxu0 0.0
        %573 = vmatprep.subr.mxu0 0.0
        %574 = vmatpush1.xpose.msra.mxu0 0.0
        %575 = vmatprep.subr.mxu0 0.0
        %576 = vmatpush1.xpose.msra.mxu0 0.0
        %577 = vmatprep.subr.mxu0 0.0
        %578 = vmatpush1.xpose.msra.mxu0 0.0
        %579 = vmatprep.subr.mxu0 0.0
        %580 = vmatpush1.xpose.msra.mxu0 0.0
        %581 = vmatprep.subr.mxu0 0.0
        %582 = vmatpush1.xpose.msra.mxu0 0.0
        %583 = vmatprep.subr.mxu0 0.0
        %584 = vmatpush1.xpose.msra.mxu0 0.0
        %585 = vmatprep.subr.mxu0 0.0
        %586 = vmatpush1.xpose.msra.mxu0 0.0
        %587 = vmatprep.mubr.f32.mxu0 0.0
        %588 = vmatmul.mubr.f32.gmra.mrb[0].mxu0 %v518
        %v589 = vpop.f32.mrb[0].mxu0
        %v590 = vadd.f32 %v272, %v589
        %v591 = vpop.f32.mrb[0].mxu0
        %592 = vdwg.mxu0
        %vm593 = vcmask 64512
        %v594 = vsel %vm593, %v590, -inf
        %595 = vmax.xlane.f32.xlu0 %v594
        %v596 = vpop.xlane.xlu0 %595
        %v597 = vsub.f32 %v590, %v596
        %v598 = vmul.f32 %v597, 1.442695
        %v599 = vpow.pop %v598
        %v600 = vsel %vm593, %v599, 0.0
        %601 = vadd.xlane.f32.xlu0 %v600
        %v602 = vpop.xlane.xlu0 %601
        %v603 = vrcp.pop %v602
        %v604 = vmul.f32 %v599, %v603
        %v606 = vsel %vm593, %v604, 0
        %608 = vmatprep.subr.mxu0 0.0
        %609 = vmatpush1.msra.mxu0 %v514
        %610 = vmatprep.subr.mxu0 0.0
        %611 = vmatpush1.msra.mxu0 0.0
        %612 = vmatprep.subr.mxu0 0.0
        %613 = vmatpush1.msra.mxu0 0.0
        %614 = vmatprep.subr.mxu0 0.0
        %615 = vmatpush1.msra.mxu0 0.0
        %616 = vmatprep.subr.mxu0 0.0
        %617 = vmatpush1.msra.mxu0 0.0
        %618 = vmatprep.subr.mxu0 0.0
        %619 = vmatpush1.msra.mxu0 0.0
        %620 = vmatprep.subr.mxu0 0.0
        %621 = vmatpush1.msra.mxu0 0.0
        %622 = vmatprep.subr.mxu0 0.0
        %623 = vmatpush1.msra.mxu0 0.0
        %624 = vmatprep.subr.mxu0 0.0
        %625 = vmatpush1.msra.mxu0 0.0
        %626 = vmatprep.subr.mxu0 0.0
        %627 = vmatpush1.msra.mxu0 0.0
        %628 = vmatprep.subr.mxu0 0.0
        %629 = vmatpush1.msra.mxu0 0.0
        %630 = vmatprep.subr.mxu0 0.0
        %631 = vmatpush1.msra.mxu0 0.0
        %632 = vmatprep.subr.mxu0 0.0
        %633 = vmatpush1.msra.mxu0 0.0
        %634 = vmatprep.subr.mxu0 0.0
        %635 = vmatpush1.msra.mxu0 0.0
        %636 = vmatprep.subr.mxu0 0.0
        %637 = vmatpush1.msra.mxu0 0.0
        %638 = vmatprep.subr.mxu0 0.0
        %639 = vmatpush1.msra.mxu0 0.0
        %640 = vmatprep.subr.mxu0 0.0
        %641 = vmatpush1.msra.mxu0 0.0
        %642 = vmatprep.subr.mxu0 0.0
        %643 = vmatpush1.msra.mxu0 0.0
        %644 = vmatprep.subr.mxu0 0.0
        %645 = vmatpush1.msra.mxu0 0.0
        %646 = vmatprep.subr.mxu0 0.0
        %647 = vmatpush1.msra.mxu0 0.0
        %648 = vmatprep.subr.mxu0 0.0
        %649 = vmatpush1.msra.mxu0 0.0
        %650 = vmatprep.subr.mxu0 0.0
        %651 = vmatpush1.msra.mxu0 0.0
        %652 = vmatprep.subr.mxu0 0.0
        %653 = vmatpush1.msra.mxu0 0.0
        %654 = vmatprep.subr.mxu0 0.0
        %655 = vmatpush1.msra.mxu0 0.0
        %656 = vmatprep.subr.mxu0 0.0
        %657 = vmatpush1.msra.mxu0 0.0
        %658 = vmatprep.subr.mxu0 0.0
        %659 = vmatpush1.msra.mxu0 0.0
        %660 = vmatprep.subr.mxu0 0.0
        %661 = vmatpush1.msra.mxu0 0.0
        %662 = vmatprep.subr.mxu0 0.0
        %663 = vmatpush1.msra.mxu0 0.0
        %664 = vmatprep.subr.mxu0 0.0
        %665 = vmatpush1.msra.mxu0 0.0
        %666 = vmatprep.subr.mxu0 0.0
        %667 = vmatpush1.msra.mxu0 0.0
        %668 = vmatprep.subr.mxu0 0.0
        %669 = vmatpush1.msra.mxu0 0.0
        %670 = vmatprep.subr.mxu0 0.0
        %671 = vmatpush1.msra.mxu0 0.0
        %672 = vmatprep.mubr.f32.mxu0 0.0
        %673 = vmatmul.mubr.f32.gmra.mrb[0].mxu0 %v606
        %v674 = vpop.f32.mrb[0].mxu0
        %v675 = vadd.f32 0.0, %v674
        %v676 = vpop.f32.mrb[0].mxu0
        %677 = vdwg.mxu0
        %s678 = scalar_lea.vmem %s3, 96
        %v679 = vld [vmem:[%s678] sm:$0xff]
        %v680 = vld [vmem:[%s678 + $0x8] sm:$0xff]
        %v681 = vld [vmem:[%s678 + $0x10] sm:$0xff]
        %v682 = vld [vmem:[%s678 + $0x18] sm:$0xff]
        %v684 = vsel %vm276, %v675, 0
        %686 = vmatprep.subr.mxu0 0.0
        %687 = vmatpush1.msra.mxu0 %v679
        %688 = vmatprep.subr.mxu0 0.0
        %689 = vmatpush1.msra.mxu0 %v680
        %690 = vmatprep.subr.mxu0 0.0
        %691 = vmatpush1.msra.mxu0 %v681
        %692 = vmatprep.subr.mxu0 0.0
        %693 = vmatpush1.msra.mxu0 %v682
        %694 = vmatprep.subr.mxu0 0.0
        %695 = vmatpush1.msra.mxu0 0.0
        %696 = vmatprep.subr.mxu0 0.0
        %697 = vmatpush1.msra.mxu0 0.0
        %698 = vmatprep.subr.mxu0 0.0
        %699 = vmatpush1.msra.mxu0 0.0
        %700 = vmatprep.subr.mxu0 0.0
        %701 = vmatpush1.msra.mxu0 0.0
        %702 = vmatprep.subr.mxu0 0.0
        %703 = vmatpush1.msra.mxu0 0.0
        %704 = vmatprep.subr.mxu0 0.0
        %705 = vmatpush1.msra.mxu0 0.0
        %706 = vmatprep.subr.mxu0 0.0
        %707 = vmatpush1.msra.mxu0 0.0
        %708 = vmatprep.subr.mxu0 0.0
        %709 = vmatpush1.msra.mxu0 0.0
        %710 = vmatprep.subr.mxu0 0.0
        %711 = vmatpush1.msra.mxu0 0.0
        %712 = vmatprep.subr.mxu0 0.0
        %713 = vmatpush1.msra.mxu0 0.0
        %714 = vmatprep.subr.mxu0 0.0
        %715 = vmatpush1.msra.mxu0 0.0
        %716 = vmatprep.subr.mxu0 0.0
        %717 = vmatpush1.msra.mxu0 0.0
        %718 = vmatprep.subr.mxu0 0.0
        %719 = vmatpush1.msra.mxu0 0.0
        %720 = vmatprep.subr.mxu0 0.0
        %721 = vmatpush1.msra.mxu0 0.0
        %722 = vmatprep.subr.mxu0 0.0
        %723 = vmatpush1.msra.mxu0 0.0
        %724 = vmatprep.subr.mxu0 0.0
        %725 = vmatpush1.msra.mxu0 0.0
        %726 = vmatprep.subr.mxu0 0.0
        %727 = vmatpush1.msra.mxu0 0.0
        %728 = vmatprep.subr.mxu0 0.0
        %729 = vmatpush1.msra.mxu0 0.0
        %730 = vmatprep.subr.mxu0 0.0
        %731 = vmatpush1.msra.mxu0 0.0
        %732 = vmatprep.subr.mxu0 0.0
        %733 = vmatpush1.msra.mxu0 0.0
        %734 = vmatprep.subr.mxu0 0.0
        %735 = vmatpush1.msra.mxu0 0.0
        %736 = vmatprep.subr.mxu0 0.0
        %737 = vmatpush1.msra.mxu0 0.0
        %738 = vmatprep.subr.mxu0 0.0
        %739 = vmatpush1.msra.mxu0 0.0
        %740 = vmatprep.subr.mxu0 0.0
        %741 = vmatpush1.msra.mxu0 0.0
        %742 = vmatprep.subr.mxu0 0.0
        %743 = vmatpush1.msra.mxu0 0.0
        %744 = vmatprep.subr.mxu0 0.0
        %745 = vmatpush1.msra.mxu0 0.0
        %746 = vmatprep.subr.mxu0 0.0
        %747 = vmatpush1.msra.mxu0 0.0
        %748 = vmatprep.subr.mxu0 0.0
        %749 = vmatpush1.msra.mxu0 0.0
        %750 = vmatprep.mubr.f32.mxu0 0.0
        %751 = vmatmul.mubr.f32.gmra.mrb[0].mxu0 %v684
        %v752 = vpop.f32.mrb[0].mxu0
        %v753 = vadd.f32 0.0, %v752
        %v754 = vpop.f32.mrb[0].mxu0
        %755 = vdwg.mxu0
        %v756 = vadd.f32 %v261, %v753
        %v757 = vmul.f32 %v756, %v756
        %v758 = vsel %vm276, %v757, 0.0
        %759 = vadd.xlane.f32.xlu0 %v758
        %v760 = vpop.xlane.xlu0 %759
        %v761 = vmul.f32 %v760, %v280
        %v762 = vadd.f32 %v761, 1e-06
        %v763 = vrsqrt.pop %v762
        %v764 = vmul.f32 %v756, %v763
        %v765 = vlaneseq
        %v766 = vshrl.u32 %v765, 7
        %v767 = vsub.s32 1, %v766
        %v768 = vrot.slane %v274, %v767
        %v769 = vmul.f32 %v764, %v768
        %v770 = vld [vmem:[%s4] sm:$0xff]
        %v771 = vld [vmem:[%s4 + $0x8] sm:$0xff]
        %v772 = vld [vmem:[%s4 + $0x10] sm:$0xff]
        %v773 = vld [vmem:[%s4 + $0x18] sm:$0xff]
        %v775 = vsel %vm276, %v769, 0
        %777 = vmatprep.subr.mxu0 0.0
        %778 = vmatpush1.msra.mxu0 %v770
        %779 = vmatprep.subr.mxu0 0.0
        %780 = vmatpush1.msra.mxu0 %v771
        %781 = vmatprep.subr.mxu0 0.0
        %782 = vmatpush1.msra.mxu0 %v772
        %783 = vmatprep.subr.mxu0 0.0
        %784 = vmatpush1.msra.mxu0 %v773
        %785 = vmatprep.subr.mxu0 0.0
        %786 = vmatpush1.msra.mxu0 0.0
        %787 = vmatprep.subr.mxu0 0.0
        %788 = vmatpush1.msra.mxu0 0.0
        %789 = vmatprep.subr.mxu0 0.0
        %790 = vmatpush1.msra.mxu0 0.0
        %791 = vmatprep.subr.mxu0 0.0
        %792 = vmatpush1.msra.mxu0 0.0
        %793 = vmatprep.subr.mxu0 0.0
        %794 = vmatpush1.msra.mxu0 0.0
        %795 = vmatprep.subr.mxu0 0.0
        %796 = vmatpush1.msra.mxu0 0.0
        %797 = vmatprep.subr.mxu0 0.0
        %798 = vmatpush1.msra.mxu0 0.0
        %799 = vmatprep.subr.mxu0 0.0
        %800 = vmatpush1.msra.mxu0 0.0
        %801 = vmatprep.subr.mxu0 0.0
        %802 = vmatpush1.msra.mxu0 0.0
        %803 = vmatprep.subr.mxu0 0.0
        %804 = vmatpush1.msra.mxu0 0.0
        %805 = vmatprep.subr.mxu0 0.0
        %806 = vmatpush1.msra.mxu0 0.0
        %807 = vmatprep.subr.mxu0 0.0
        %808 = vmatpush1.msra.mxu0 0.0
        %809 = vmatprep.subr.mxu0 0.0
        %810 = vmatpush1.msra.mxu0 0.0
        %811 = vmatprep.subr.mxu0 0.0
        %812 = vmatpush1.msra.mxu0 0.0
        %813 = vmatprep.subr.mxu0 0.0
        %814 = vmatpush1.msra.mxu0 0.0
        %815 = vmatprep.subr.mxu0 0.0
        %816 = vmatpush1.msra.mxu0 0.0
        %817 = vmatprep.subr.mxu0 0.0
        %818 = vmatpush1.msra.mxu0 0.0
        %819 = vmatprep.subr.mxu0 0.0
        %820 = vmatpush1.msra.mxu0 0.0
        %821 = vmatprep.subr.mxu0 0.0
        %822 = vmatpush1.msra.mxu0 0.0
        %823 = vmatprep.subr.mxu0 0.0
        %824 = vmatpush1.msra.mxu0 0.0
        %825 = vmatprep.subr.mxu0 0.0
        %826 = vmatpush1.msra.mxu0 0.0
        %827 = vmatprep.subr.mxu0 0.0
        %828 = vmatpush1.msra.mxu0 0.0
        %829 = vmatprep.subr.mxu0 0.0
        %830 = vmatpush1.msra.mxu0 0.0
        %831 = vmatprep.subr.mxu0 0.0
        %832 = vmatpush1.msra.mxu0 0.0
        %833 = vmatprep.subr.mxu0 0.0
        %834 = vmatpush1.msra.mxu0 0.0
        %835 = vmatprep.subr.mxu0 0.0
        %836 = vmatpush1.msra.mxu0 0.0
        %837 = vmatprep.subr.mxu0 0.0
        %838 = vmatpush1.msra.mxu0 0.0
        %839 = vmatprep.subr.mxu0 0.0
        %840 = vmatpush1.msra.mxu0 0.0
        %841 = vmatprep.mubr.f32.mxu0 0.0
        %842 = vmatmul.mubr.f32.gmra.mrb[0].mxu0 %v775
        %v843 = vpop.f32.mrb[0].mxu0
        %v844 = vadd.f32 0.0, %v843
        %v845 = vpop.f32.mrb[0].mxu0
        %846 = vdwg.mxu0
        %v847 = vmax.f32 %v844, 0.0
        %v848 = vld [vmem:[%s5] sm:$0xff]
        %v849 = vld [vmem:[%s5 + $0x8] sm:$0xff]
        %v850 = vld [vmem:[%s5 + $0x10] sm:$0xff]
        %v851 = vld [vmem:[%s5 + $0x18] sm:$0xff]
        %v852 = vld [vmem:[%s5 + $0x20] sm:$0xff]
        %v853 = vld [vmem:[%s5 + $0x28] sm:$0xff]
        %v854 = vld [vmem:[%s5 + $0x30] sm:$0xff]
        %v855 = vld [vmem:[%s5 + $0x38] sm:$0xff]
        %vm856 = vcmask 523264
        %v858 = vsel %vm856, %v847, 0
        %860 = vmatprep.subr.mxu0 0.0
        %861 = vmatpush1.msra.mxu0 %v848
        %862 = vmatprep.subr.mxu0 0.0
        %863 = vmatpush1.msra.mxu0 %v849
        %864 = vmatprep.subr.mxu0 0.0
        %865 = vmatpush1.msra.mxu0 %v850
        %866 = vmatprep.subr.mxu0 0.0
        %867 = vmatpush1.msra.mxu0 %v851
        %868 = vmatprep.subr.mxu0 0.0
        %869 = vmatpush1.msra.mxu0 %v852
        %870 = vmatprep.subr.mxu0 0.0
        %871 = vmatpush1.msra.mxu0 %v853
        %872 = vmatprep.subr.mxu0 0.0
        %873 = vmatpush1.msra.mxu0 %v854
        %874 = vmatprep.subr.mxu0 0.0
        %875 = vmatpush1.msra.mxu0 %v855
        %876 = vmatprep.subr.mxu0 0.0
        %877 = vmatpush1.msra.mxu0 0.0
        %878 = vmatprep.subr.mxu0 0.0
        %879 = vmatpush1.msra.mxu0 0.0
        %880 = vmatprep.subr.mxu0 0.0
        %881 = vmatpush1.msra.mxu0 0.0
        %882 = vmatprep.subr.mxu0 0.0
        %883 = vmatpush1.msra.mxu0 0.0
        %884 = vmatprep.subr.mxu0 0.0
        %885 = vmatpush1.msra.mxu0 0.0
        %886 = vmatprep.subr.mxu0 0.0
        %887 = vmatpush1.msra.mxu0 0.0
        %888 = vmatprep.subr.mxu0 0.0
        %889 = vmatpush1.msra.mxu0 0.0
        %890 = vmatprep.subr.mxu0 0.0
        %891 = vmatpush1.msra.mxu0 0.0
        %892 = vmatprep.subr.mxu0 0.0
        %893 = vmatpush1.msra.mxu0 0.0
        %894 = vmatprep.subr.mxu0 0.0
        %895 = vmatpush1.msra.mxu0 0.0
        %896 = vmatprep.subr.mxu0 0.0
        %897 = vmatpush1.msra.mxu0 0.0
        %898 = vmatprep.subr.mxu0 0.0
        %899 = vmatpush1.msra.mxu0 0.0
        %900 = vmatprep.subr.mxu0 0.0
        %901 = vmatpush1.msra.mxu0 0.0
        %902 = vmatprep.subr.mxu0 0.0
        %903 = vmatpush1.msra.mxu0 0.0
        %904 = vmatprep.subr.mxu0 0.0
        %905 = vmatpush1.msra.mxu0 0.0
        %906 = vmatprep.subr.mxu0 0.0
        %907 = vmatpush1.msra.mxu0 0.0
        %908 = vmatprep.subr.mxu0 0.0
        %909 = vmatpush1.msra.mxu0 0.0
        %910 = vmatprep.subr.mxu0 0.0
        %911 = vmatpush1.msra.mxu0 0.0
        %912 = vmatprep.subr.mxu0 0.0
        %913 = vmatpush1.msra.mxu0 0.0
        %914 = vmatprep.subr.mxu0 0.0
        %915 = vmatpush1.msra.mxu0 0.0
        %916 = vmatprep.subr.mxu0 0.0
        %917 = vmatpush1.msra.mxu0 0.0
        %918 = vmatprep.subr.mxu0 0.0
        %919 = vmatpush1.msra.mxu0 0.0
        %920 = vmatprep.subr.mxu0 0.0
        %921 = vmatpush1.msra.mxu0 0.0
        %922 = vmatprep.subr.mxu0 0.0
        %923 = vmatpush1.msra.mxu0 0.0
        %924 = vmatprep.mubr.f32.mxu0 0.0
        %925 = vmatmul.mubr.f32.gmra.mrb[0].mxu0 %v858
        %v926 = vpop.f32.mrb[0].mxu0
        %v927 = vadd.f32 0.0, %v926
        %v928 = vpop.f32.mrb[0].mxu0
        %929 = vdwg.mxu0
        %v930 = vadd.f32 %v756, %v927
        %v931 = vmul.f32 %v930, %v930
        %v932 = vsel %vm276, %v931, 0.0
        %933 = vadd.xlane.f32.xlu0 %v932
        %v934 = vpop.xlane.xlu0 %933
        %v935 = vmul.f32 %v934, %v280
        %v936 = vadd.f32 %v935, 1e-06
        %v937 = vrsqrt.pop %v936
        %v938 = vmul.f32 %v930, %v937
        %v939 = vlaneseq
        %v940 = vshrl.u32 %v939, 7
        %v941 = vsub.s32 2, %v940
        %v942 = vrot.slane %v274, %v941
        %v943 = vmul.f32 %v938, %v942
        %944 = vst.msk [vmem:[%s253] sm:$0xff] %vm276, %v943
        %s945 = sand.u32 %s164, 1
        %s946 = scalar_lea.sflag [#allocation3], %s945
        %s947 = sand.u32 %s164, 1
        %s948 = smul.addr %s947, 8
        %s949 = scalar_lea.vmem [#allocation2], %s948
        // Predicated region
        $region45: #{encoder_wrapper_forward.1} parent=43 // pred_check
          %p950 = pneg %p174
        $region46: #{encoder_wrapper_forward.1} parent=43 // pred_check_branch
          %952 = sbr.rel (%p950) target = $region48
        $region47: #{encoder_wrapper_forward.1} parent=43 // pred_region
          %s954 = ssub.s32 128, 128
          %955 = vsyncadd %s946, %s954
          %s956 = smul.addr %s20, 128
          %s957 = scalar_lea.hbm %s6, %s956
          %s959 = sshll.u32 %s949, 4
          %s960 = int_to_ptr.vmem [resolvable:$true] %s959
          %962 = dma.vmem_to_hbm [thread:$0]  %s960, 128, %s957, %s946
        $region48: #{encoder_wrapper_forward.1} parent=43 // pred_fallthru
          _
      $region44: #{encoder_wrapper_forward.1} parent=5 // pred_fallthru
        _
      %p963 = scmp.le.s32.totalorder 2, %s15
      // Predicated region
      $region49: #{encoder_wrapper_forward.1} parent=5 // pred_check
        %p964 = pneg %p963
      $region50: #{encoder_wrapper_forward.1} parent=5 // pred_check_branch
        %966 = sbr.rel (%p964) target = $region52
      $region51: #{encoder_wrapper_forward.1} parent=5 // pred_region
        %s967 = ssub.s32 %s15, 2
        // Predicated region
        $region53: #{encoder_wrapper_forward.1} parent=51 // pred_check
          %p968 = pneg %p180
        $region54: #{encoder_wrapper_forward.1} parent=51 // pred_check_branch
          %970 = sbr.rel (%p968) target = $region56
        $region55: #{encoder_wrapper_forward.1} parent=51 // pred_region
          %s971 = sand.u32 %s165, 1
          %s972 = scalar_lea.sflag [#allocation3], %s971
          %s973 = sand.u32 %s165, 1
          %s974 = smul.addr %s973, 8
          %s975 = scalar_lea.vmem [#allocation2], %s974
          %976 = dma.done %s972, 128
        $region56: #{encoder_wrapper_forward.1} parent=51 // pred_fallthru
          _
      $region52: #{encoder_wrapper_forward.1} parent=5 // pred_fallthru
        _
    $region6: #{encoder_wrapper_forward.1} parent=1 // loop_footer
      %s19 = sadd.s32 1, %s15
    $region7: #{encoder_wrapper_forward.1} parent=1 // loop_footer_branch
      %14 = sbr.rel target = $region3
    $region8: #{encoder_wrapper_forward.1} parent=1 // loop_exit
      _
    %977 = vsyncpa [#allocation3], 1
    %s978 = scalar_lea.sflag [#allocation3], 1
    %979 = vsyncpa %s978, 1

</llo_original>
